<compile_context>
chip_gen: v5e
topology: v5e:2x2
jax: 0.10.0
libtpu: 0.0.40
codegen_flags: <defaults>
</compile_context>

<pallas_src>
import math
import jax
import jax.numpy as jnp
from jax.experimental import pallas as pl
from jax.experimental.pallas import tpu as pltpu

MAX_LEN = 2000          # matches `max_len = 2000` in the reference script
_LANE = 128
_SUBLANE = 8
# Per-x-block byte budget. Live blocks per step: x, out (b_tile rows) and pe
# (1 batch slice), all double-buffered -> roughly 5x this budget (~10 MiB),
# which fits v5e's 16 MiB default scoped VMEM and leaves headroom elsewhere.
_MAX_BLOCK_BYTES = 2 * 1024 * 1024
_VMEM_LIMIT_BYTES = 32 * 1024 * 1024


def make_pe_table(d_model: int, max_len: int = MAX_LEN) -> jnp.ndarray:
    """Sinusoidal table, shape [1, max_len, d_model], float32 (odd D safe)."""
    position = jnp.arange(0, max_len, dtype=jnp.float32)[:, None]            # [L, 1]
    div_term = jnp.exp(
        jnp.arange(0, d_model, 2, dtype=jnp.float32) * -(math.log(10000.0) / d_model)
    )                                                                         # [ceil(D/2)]
    angles = position * div_term                                              # [L, ceil(D/2)]
    pe = jnp.zeros((max_len, d_model), dtype=jnp.float32)
    pe = pe.at[:, 0::2].set(jnp.sin(angles))
    pe = pe.at[:, 1::2].set(jnp.cos(angles)[:, : d_model // 2])
    return pe[None, :, :]                                                     # [1, L, D]


def _add_pe_kernel(x_ref, pe_ref, o_ref):
    # x_ref / o_ref: (b_tile, tile_r, cols); pe_ref: (1, tile_r, cols).
    # pe broadcasts over the leading batch-tile axis.
    o_ref[...] = (x_ref[...] + pe_ref[...]).astype(o_ref.dtype)


def _choose_tiles(B: int, rows: int, cols: int, itemsize: int):
    """Row tile (multiple of 8 or full extent) + batch tile within the budget."""
    max_rows = max(_SUBLANE, _MAX_BLOCK_BYTES // max(1, cols * itemsize))
    tile_r = min(rows, max_rows)
    tile_r = max(_SUBLANE, (tile_r // _SUBLANE) * _SUBLANE)
    if tile_r >= rows:
        tile_r = rows                       # single block covers all rows
    if tile_r == rows:
        # Whole sequence fits in one block: pack several batch entries per
        # grid step to amortize the ~0.35 us per-step overhead.
        b_tile = max(1, min(B, _MAX_BLOCK_BYTES // max(1, rows * cols * itemsize)))
    else:
        b_tile = 1
    return tile_r, b_tile


def _add_pe_tiled(x3: jnp.ndarray, pe3: jnp.ndarray) -> jnp.ndarray:
    """x3: [B, rows, cols]; pe3: [1, rows_pe, cols] with rows_pe >= rows."""
    B, rows, cols = x3.shape
    rows_pe = pe3.shape[1]
    itemsize = x3.dtype.itemsize
    tile_r, b_tile = _choose_tiles(B, rows, cols, itemsize)
    num_r = pl.cdiv(rows, tile_r)
    num_b = pl.cdiv(B, b_tile)

    if num_r == 1 and rows % _SUBLANE != 0 and rows != rows_pe:
        # Single block whose sublane extent is neither a multiple of 8 nor
        # pe's full row extent: trim pe so the (8,128) BlockSpec rule holds.
        # Only hit for tiny problems, so the extra slice traffic is negligible.
        pe3 = pe3[:, :rows, :]
        rows_pe = rows

    grid = (num_r, num_b)   # batch innermost -> pe block stays resident across it

    return pl.pallas_call(
        _add_pe_kernel,
        out_shape=jax.ShapeDtypeStruct((B, rows, cols), x3.dtype),
        grid_spec=pltpu.PrefetchScalarGridSpec(
            num_scalar_prefetch=0,
            grid=grid,
            in_specs=[
                pl.BlockSpec((b_tile, tile_r, cols), lambda r, b: (b, r, 0)),  # x
                pl.BlockSpec((1, tile_r, cols), lambda r, b: (0, r, 0)),       # pe (bcast)
            ],
            out_specs=pl.BlockSpec((b_tile, tile_r, cols), lambda r, b: (b, r, 0)),
        ),
        compiler_params=pltpu.CompilerParams(
            dimension_semantics=("parallel", "parallel"),
            vmem_limit_bytes=_VMEM_LIMIT_BYTES,
        ),
    )(x3, pe3)


def positional_encoding_forward(x: jnp.ndarray, pe: jnp.ndarray) -> jnp.ndarray:
    """x: [B, S, D], pe: [1, max_len, D] -> [B, S, D] (dtype of x)."""
    B, S, D = x.shape
    max_len_pe = pe.shape[1]
    assert S <= max_len_pe, "sequence longer than positional-encoding table"

    if pe.dtype != x.dtype:
        # Cast once in the wrapper so the in-kernel add stays in x's dtype and
        # pe DMA traffic matches x's width (no-op for the f32 reference case).
        pe = pe.astype(x.dtype)

    if D % _LANE != 0 and (S * D) % _LANE == 0 and (max_len_pe * D) % _LANE == 0:
        # Lane-dense path: fold (seq, d_model) -> (rows, 128) so stores use the
        # full 128-lane vst. Row-major fold of both x and pe preserves the
        # elementwise correspondence. Reshape of contiguous HBM arrays is free.
        rows = (S * D) // _LANE
        rows_pe = (max_len_pe * D) // _LANE
        out = _add_pe_tiled(x.reshape(B, rows, _LANE),
                            pe.reshape(1, rows_pe, _LANE))
        return out.reshape(B, S, D)

    # General path (D already a multiple of 128, or shapes that don't fold).
    return _add_pe_tiled(x, pe)
    # TODO(synk): the reference's `.cuda()` device move has no JAX/TPU analogue.


if __name__ == "__main__":
    batch, seq_len, d_model = 2, 8, 32

    key = jax.random.PRNGKey(0)
    x = jax.random.normal(key, (batch, seq_len, d_model), dtype=jnp.float32)
    pe = make_pe_table(d_model, MAX_LEN)

    out = jax.block_until_ready(positional_encoding_forward(x, pe))
    ref = x + pe[:, :seq_len, :]
    assert out.shape == (batch, seq_len, d_model)
    assert jnp.allclose(out, ref, atol=1e-6), "mismatch (lane-dense fold path)"

    # Exercise the general path (D is a multiple of 128, no fold needed).
    d_model2, seq2 = 128, 16
    x2 = jax.random.normal(jax.random.PRNGKey(0), (batch, seq2, d_model2),
                           dtype=jnp.float32)
    pe2 = make_pe_table(d_model2, MAX_LEN)
    out2 = jax.block_until_ready(positional_encoding_forward(x2, pe2))
    assert jnp.allclose(out2, x2 + pe2[:, :seq2, :], atol=1e-6), \
        "mismatch (general / lane-aligned path)"

    # Exercise the non-foldable narrow-D path (masked lane stores) + pe trim.
    batch3, seq3, d_model3 = 3, 10, 24
    x3 = jax.random.normal(jax.random.PRNGKey(0), (batch3, seq3, d_model3),
                           dtype=jnp.float32)
    pe3 = make_pe_table(d_model3, MAX_LEN)
    out3 = jax.block_until_ready(positional_encoding_forward(x3, pe3))
    assert jnp.allclose(out3, x3 + pe3[:, :seq3, :], atol=1e-6), \
        "mismatch (non-foldable narrow-D path)"

    print("KERNEL_OK")
</pallas_src>

<mosaic_0001>
module attributes {stable_mosaic.version = 11 : i64} {
  func.func @_add_pe_kernel(%arg0: i32, %arg1: i32, %arg2: memref<2x2x128xf32, #tpu.memory_space<vmem>>, %arg3: memref<1x2x128xf32, #tpu.memory_space<vmem>>, %arg4: memref<2x2x128xf32, #tpu.memory_space<vmem>>) attributes {dimension_semantics = [#tpu.dimension_semantics<parallel>, #tpu.dimension_semantics<parallel>], iteration_bounds = array<i64: 1, 1>, scalar_prefetch = 0 : i64, scratch_operands = 0 : i64, tpu.core_type = #tpu.core_type<tc>, window_params = [{transform_indices = @transform_0, window_bounds = array<i64: 2, 2, 128>}, {transform_indices = @transform_1, window_bounds = array<i64: 1, 2, 128>}, {transform_indices = @transform_2, window_bounds = array<i64: 2, 2, 128>}]} {
    %c0 = arith.constant 0 : index
    %c0_0 = arith.constant 0 : index
    %c0_1 = arith.constant 0 : index
    %0 = vector.load %arg2[%c0, %c0_0, %c0_1] : memref<2x2x128xf32, #tpu.memory_space<vmem>>, vector<2x2x128xf32>
    %c0_2 = arith.constant 0 : index
    %c0_3 = arith.constant 0 : index
    %c0_4 = arith.constant 0 : index
    %1 = vector.load %arg3[%c0_2, %c0_3, %c0_4] : memref<1x2x128xf32, #tpu.memory_space<vmem>>, vector<1x2x128xf32>
    %2 = vector.broadcast %1 : vector<1x2x128xf32> to vector<2x2x128xf32>
    %3 = arith.addf %0, %2 : vector<2x2x128xf32>
    %c0_5 = arith.constant 0 : index
    %c0_6 = arith.constant 0 : index
    %c0_7 = arith.constant 0 : index
    %4 = vector.load %arg4[%c0_5, %c0_6, %c0_7] : memref<2x2x128xf32, #tpu.memory_space<vmem>>, vector<2x2x128xf32>
    tpu.vector_store %arg4[%c0_5, %c0_6, %c0_7], %3 {strides = array<i32>} : memref<2x2x128xf32, #tpu.memory_space<vmem>>, vector<2x2x128xf32>,
    return
  }
  func.func @transform_0(%arg0: i32, %arg1: i32) -> (i32, i32, i32) {
    %c0_i32 = arith.constant 0 : i32
    %c0_i32_0 = arith.constant 0 : i32
    return %arg1, %arg0, %c0_i32 : i32, i32, i32
  }
  func.func @transform_1(%arg0: i32, %arg1: i32) -> (i32, i32, i32) {
    %c0_i32 = arith.constant 0 : i32
    %c0_i32_0 = arith.constant 0 : i32
    %c0_i32_1 = arith.constant 0 : i32
    return %c0_i32, %arg0, %c0_i32_0 : i32, i32, i32
  }
  func.func @transform_2(%arg0: i32, %arg1: i32) -> (i32, i32, i32) {
    %c0_i32 = arith.constant 0 : i32
    %c0_i32_0 = arith.constant 0 : i32
    return %arg1, %arg0, %c0_i32 : i32, i32, i32
  }
}

</mosaic_0001>

<llo_original>
// kernel: tpu_custom_call.1
$region0: #{tpu_custom_call.1}
  #allocation0 [shape = 'u32[]', space=smem, size = 0x4, offset = 0x4, fixed_abs, tag = 'smem constant byte address 0x4 - core index']
  #allocation1 [shape = 'u32[72,128]{1,0:T(1,128)}', space=vmem, size = 0x9000, scoped, tag = 'internal scratch']
  %s0 = inlined_call_operand.hbm [shape: f32[2,2,128], index: 0, kind: input, shape index: {}]
  %s1 = inlined_call_operand.hbm [shape: f32[1,2,128], index: 1, kind: input, shape index: {}]
  %s2 = inlined_call_operand.hbm [shape: f32[2,2,128], index: 2, kind: output, shape index: {}]
  %s3 = sld [smem:[#allocation0]]
  $region26: #{tpu_custom_call.1} parent=0
    _
  %s5 = ssub.s32 1, %s3
  %s6 = scalar_select 0, %s5, %s3
  $region1: #{tpu_custom_call.1} parent=0
    #allocation2 [shape = 'u8[2048]{0}', space=vmem, size = 0x800, scoped, tag = 'input window, operand 0, single buffered']
    #allocation3 [shape = 's32[1]{0}', space=sflag, size = 0x4, scoped, tag = 'scoped memory for tpu_custom_call.1']
    #allocation4 [shape = 's32[1]{0}', space=sflag, size = 0x4, scoped, tag = 'scoped memory for tpu_custom_call.1']
    #allocation5 [shape = 'u8[1024]{0}', space=vmem, size = 0x400, scoped, tag = 'input window, operand 1, single buffered']
    #allocation6 [shape = 's32[1]{0}', space=sflag, size = 0x4, scoped, tag = 'scoped memory for tpu_custom_call.1']
    #allocation7 [shape = 'u8[2048]{0}', space=vmem, size = 0x800, scoped, tag = 'output window, operand 0, single buffered']
    %7 = vsyncpa [#allocation3], 0
    %8 = vsyncpa [#allocation6], 0
    %9 = vsyncpa [#allocation4], 0
    // Predicated region
    $region2: #{tpu_custom_call.1} parent=1 // pred_check
      _
    $region3: #{tpu_custom_call.1} parent=1 // pred_check_branch
      %11 = sbr.rel (0) target = $region5
    $region4: #{tpu_custom_call.1} parent=1 // pred_region
      %13 = vsyncadd [#allocation3], 0
      %s14 = sshll.u32 %s0, 4
      %s15 = int_to_ptr.hbm [resolvable:$true] %s14
      %s16 = sshll.u32 [#allocation2], 4
      %s17 = int_to_ptr.vmem [resolvable:$true] %s16
      %22 = dma.hbm_to_vmem [thread:$0]  %s15, 64, %s17, [#allocation3], 32, 32, 2
    $region5: #{tpu_custom_call.1} parent=1 // pred_fallthru
      _
    // Predicated region
    $region6: #{tpu_custom_call.1} parent=1 // pred_check
      _
    $region7: #{tpu_custom_call.1} parent=1 // pred_check_branch
      %24 = sbr.rel (0) target = $region9
    $region8: #{tpu_custom_call.1} parent=1 // pred_region
      %26 = vsyncadd [#allocation6], 0
      %s28 = sshll.u32 %s1, 4
      %s29 = int_to_ptr.hbm [resolvable:$true] %s28
      %s30 = sshll.u32 [#allocation5], 4
      %s31 = int_to_ptr.vmem [resolvable:$true] %s30
      %33 = dma.hbm_to_vmem [thread:$0]  %s29, 32, %s31, [#allocation6]
    $region9: #{tpu_custom_call.1} parent=1 // pred_fallthru
      _
    // Predicated region
    $region10: #{tpu_custom_call.1} parent=1 // pred_check
      _
    $region11: #{tpu_custom_call.1} parent=1 // pred_check_branch
      %35 = sbr.rel (0) target = $region13
    $region12: #{tpu_custom_call.1} parent=1 // pred_region
      %37 = dma.done [#allocation3], 64
    $region13: #{tpu_custom_call.1} parent=1 // pred_fallthru
      _
    // Predicated region
    $region14: #{tpu_custom_call.1} parent=1 // pred_check
      _
    $region15: #{tpu_custom_call.1} parent=1 // pred_check_branch
      %39 = sbr.rel (0) target = $region17
    $region16: #{tpu_custom_call.1} parent=1 // pred_region
      %41 = dma.done [#allocation6], 32
    $region17: #{tpu_custom_call.1} parent=1 // pred_fallthru
      _
    %v42 = vld [vmem:[#allocation2] sm:$0x3]
    %v43 = vld [vmem:[#allocation2 + $0x2] sm:$0x3]
    %v44 = vld [vmem:[#allocation5] sm:$0x3]
    %v45 = vadd.f32 %v42, %v44
    %v46 = vadd.f32 %v43, %v44
    %47 = vst [vmem:[#allocation7] sm:$0x3] %v45
    %48 = vst [vmem:[#allocation7 + $0x2] sm:$0x3] %v46
    // Predicated region
    $region18: #{tpu_custom_call.1} parent=1 // pred_check
      _
    $region19: #{tpu_custom_call.1} parent=1 // pred_check_branch
      %50 = sbr.rel (0) target = $region21
    $region20: #{tpu_custom_call.1} parent=1 // pred_region
      %52 = vsyncadd [#allocation4], 0
      %s53 = sshll.u32 [#allocation7], 4
      %s54 = int_to_ptr.vmem [resolvable:$true] %s53
      %s55 = sshll.u32 %s2, 4
      %s56 = int_to_ptr.hbm [resolvable:$true] %s55
      %61 = dma.vmem_to_hbm [thread:$0]  %s54, 64, %s56, [#allocation4], 32, 32, 2
    $region21: #{tpu_custom_call.1} parent=1 // pred_fallthru
      _
    // Predicated region
    $region22: #{tpu_custom_call.1} parent=1 // pred_check
      _
    $region23: #{tpu_custom_call.1} parent=1 // pred_check_branch
      %63 = sbr.rel (0) target = $region25
    $region24: #{tpu_custom_call.1} parent=1 // pred_region
      %65 = dma.done [#allocation4], 64
    $region25: #{tpu_custom_call.1} parent=1 // pred_fallthru
      _
    %66 = vsyncpa [#allocation3], 1
    %67 = vsyncpa [#allocation6], 1
    %68 = vsyncpa [#allocation4], 1

</llo_original>
